<compile_context>
chip_gen: v7x
topology: tpu7x:2x2x1
jax: 0.10.0
libtpu: 0.0.40
codegen_flags: <defaults>
</compile_context>

<pallas_src>
import functools
import math

import jax
import jax.numpy as jnp
from jax.experimental import pallas as pl
from jax.experimental.pallas import tpu as pltpu


# ------------------------------ tiling helpers --------------------------------

def _row_tile(M):
    """Largest row tile (multiple of 128, up to 512) dividing M, else full M."""
    for t in (512, 256, 128):
        if M % t == 0:
            return t
    return M


def _col_tile(N):
    """Largest lane tile (multiple of 128, up to 512) dividing N, else full N."""
    for t in (512, 256, 128):
        if N % t == 0:
            return t
    return N


# ------------------------------- Pallas kernels --------------------------------

def _dense_kernel(x_ref, w_ref, b_ref, o_ref, *, act):
    # bf16 operands on the MXU, f32 accumulation + f32 epilogue.
    y = jnp.dot(x_ref[...], w_ref[...], preferred_element_type=jnp.float32)
    y = y + b_ref[...].astype(jnp.float32)
    if act == "gelu":
        # TODO(synk): HF RoBERTa uses exact erf GELU; tanh approximation deviates ~1e-3.
        y = 0.5 * y * (1.0 + jnp.tanh(0.7978845608028654 * (y + 0.044715 * y * y * y)))
    elif act == "tanh":
        y = jnp.tanh(y)
    o_ref[...] = y.astype(o_ref.dtype)


def dense(x, w, b, act="none", out_dtype=jnp.bfloat16):
    """x: [M, K] @ w: [K, N] + b with fused activation.  N is tiled so large
    weight matrices never need to be fully VMEM-resident."""
    M, K = x.shape
    _, N = w.shape
    TM, TN = _row_tile(M), _col_tile(N)
    return pl.pallas_call(
        functools.partial(_dense_kernel, act=act),
        out_shape=jax.ShapeDtypeStruct((M, N), out_dtype),
        grid_spec=pltpu.PrefetchScalarGridSpec(
            num_scalar_prefetch=0,
            grid=(M // TM, N // TN),
            in_specs=[
                pl.BlockSpec((TM, K), lambda i, j: (i, 0)),
                pl.BlockSpec((K, TN), lambda i, j: (0, j)),
                pl.BlockSpec((1, TN), lambda i, j: (0, j)),
            ],
            out_specs=pl.BlockSpec((TM, TN), lambda i, j: (i, j)),
        ),
        compiler_params=pltpu.CompilerParams(
            dimension_semantics=("parallel", "parallel")),
    )(x, w, b.reshape(1, N))


def _dense_add_ln_kernel(x_ref, w_ref, b_ref, r_ref, g_ref, beta_ref, o_ref, *, eps):
    # y = LayerNorm(x @ W + b + residual); all reductions in f32.
    y = jnp.dot(x_ref[...], w_ref[...], preferred_element_type=jnp.float32)
    y = y + b_ref[...].astype(jnp.float32) + r_ref[...].astype(jnp.float32)
    mean = jnp.mean(y, axis=-1, keepdims=True)
    var = jnp.mean((y - mean) * (y - mean), axis=-1, keepdims=True)
    yn = (y - mean) * jax.lax.rsqrt(var + eps)
    o_ref[...] = (yn * g_ref[...].astype(jnp.float32)
                  + beta_ref[...].astype(jnp.float32)).astype(o_ref.dtype)


def dense_add_layernorm(x, w, b, r, g, beta, eps, out_dtype=jnp.bfloat16):
    """Fused (x @ w + b + residual) -> LayerNorm.  The full hidden dim stays on
    the lane axis because LN needs the whole row."""
    M, K = x.shape
    _, H = w.shape
    TM = _row_tile(M)
    return pl.pallas_call(
        functools.partial(_dense_add_ln_kernel, eps=eps),
        out_shape=jax.ShapeDtypeStruct((M, H), out_dtype),
        grid_spec=pltpu.PrefetchScalarGridSpec(
            num_scalar_prefetch=0,
            grid=(M // TM,),
            in_specs=[
                pl.BlockSpec((TM, K), lambda i: (i, 0)),
                pl.BlockSpec((K, H), lambda i: (0, 0)),
                pl.BlockSpec((1, H), lambda i: (0, 0)),
                pl.BlockSpec((TM, H), lambda i: (i, 0)),
                pl.BlockSpec((1, H), lambda i: (0, 0)),
                pl.BlockSpec((1, H), lambda i: (0, 0)),
            ],
            out_specs=pl.BlockSpec((TM, H), lambda i: (i, 0)),
        ),
        compiler_params=pltpu.CompilerParams(dimension_semantics=("parallel",)),
    )(x, w, b.reshape(1, H), r, g.reshape(1, H), beta.reshape(1, H))


def _ln_kernel(x_ref, g_ref, b_ref, o_ref, *, eps):
    x = x_ref[...].astype(jnp.float32)
    mean = jnp.mean(x, axis=-1, keepdims=True)
    var = jnp.mean((x - mean) * (x - mean), axis=-1, keepdims=True)
    y = (x - mean) * jax.lax.rsqrt(var + eps)
    o_ref[...] = (y * g_ref[...].astype(jnp.float32)
                  + b_ref[...].astype(jnp.float32)).astype(o_ref.dtype)


def layernorm(x, g, b, eps, out_dtype=jnp.bfloat16):
    """LayerNorm over the last axis (embedding LN — no residual input)."""
    M, H = x.shape
    TM = _row_tile(M)
    return pl.pallas_call(
        functools.partial(_ln_kernel, eps=eps),
        out_shape=jax.ShapeDtypeStruct((M, H), out_dtype),
        grid_spec=pltpu.PrefetchScalarGridSpec(
            num_scalar_prefetch=0,
            grid=(M // TM,),
            in_specs=[
                pl.BlockSpec((TM, H), lambda i: (i, 0)),
                pl.BlockSpec((1, H), lambda i: (0, 0)),
                pl.BlockSpec((1, H), lambda i: (0, 0)),
            ],
            out_specs=pl.BlockSpec((TM, H), lambda i: (i, 0)),
        ),
        compiler_params=pltpu.CompilerParams(dimension_semantics=("parallel",)),
    )(x, g.reshape(1, H), b.reshape(1, H))


def _attn_kernel(q_ref, k_ref, v_ref, m_ref, o_ref, *, scale, nH, dH):
    # One batch element per grid step; all heads handled inside on column
    # sub-slices of the already lane-dense (S, H) Q/K/V slabs.  The merged
    # context is written back with a single lane-dense (S, H) store — no head
    # transposes anywhere in the pipeline.
    bias = m_ref[...].astype(jnp.float32)       # (1, S) additive mask bias
    q = q_ref[...]                              # (S, H) bf16
    k = k_ref[...]
    v = v_ref[...]
    ctxs = []
    for h in range(nH):                         # static unroll over heads
        sl = slice(h * dH, (h + 1) * dH)
        qh, kh, vh = q[:, sl], k[:, sl], v[:, sl]
        s = jax.lax.dot_general(qh, kh, (((1,), (1,)), ((), ())),
                                preferred_element_type=jnp.float32) * scale + bias
        s = s - jnp.max(s, axis=-1, keepdims=True)
        p = jnp.exp(s)
        p = p * pl.reciprocal(jnp.sum(p, axis=-1, keepdims=True), approx=True)
        ctxs.append(jnp.dot(p.astype(vh.dtype), vh,
                            preferred_element_type=jnp.float32))
    o_ref[...] = jnp.concatenate(ctxs, axis=-1).astype(o_ref.dtype)


def attention(qkv, mask_bias, B, S, H, nH):
    """qkv: [B*S, 3H] (columns = Q | K | V), mask_bias: [B, 1, S] additive bias.
    Returns merged context [B*S, H].  The Q/K/V slabs are selected purely via the
    BlockSpec column block index — no transposes or slices in the glue."""
    M = B * S
    dH = H // nH
    return pl.pallas_call(
        functools.partial(_attn_kernel, scale=1.0 / math.sqrt(dH), nH=nH, dH=dH),
        out_shape=jax.ShapeDtypeStruct((M, H), jnp.bfloat16),
        grid_spec=pltpu.PrefetchScalarGridSpec(
            num_scalar_prefetch=0,
            grid=(B,),
            in_specs=[
                pl.BlockSpec((S, H), lambda b: (b, 0)),            # Q slab
                pl.BlockSpec((S, H), lambda b: (b, 1)),            # K slab
                pl.BlockSpec((S, H), lambda b: (b, 2)),            # V slab
                pl.BlockSpec((None, 1, S), lambda b: (b, 0, 0)),   # mask bias row
            ],
            out_specs=pl.BlockSpec((S, H), lambda b: (b, 0)),
        ),
        compiler_params=pltpu.CompilerParams(dimension_semantics=("parallel",)),
    )(qkv, qkv, qkv, mask_bias)


# -------------------------------- model glue ------------------------------------

CFG = dict(vocab=100, hidden=128, heads=4, layers=2, inter=256,
           max_pos=40, pad_id=1, eps=1e-5)


def init_params(key, cfg):
    ks = iter(jax.random.split(key, 256))
    H, I = cfg["hidden"], cfg["inter"]

    def nrm(shape, dtype=jnp.bfloat16):
        return (0.02 * jax.random.normal(next(ks), shape, dtype=jnp.float32)).astype(dtype)

    p = {
        "word_emb": nrm((cfg["vocab"], H), jnp.float32),
        "pos_emb": nrm((cfg["max_pos"], H), jnp.float32),
        "type_emb": nrm((1, H), jnp.float32),
        "emb_ln_g": jnp.ones((H,), jnp.float32),
        "emb_ln_b": jnp.zeros((H,), jnp.float32),
        "pooler_w": nrm((H, H)),
        "pooler_b": jnp.zeros((H,), jnp.float32),
        "layers": [],
    }
    for _ in range(cfg["layers"]):
        p["layers"].append({
            # fused Q|K|V projection: [H, 3H] weight, [3H] bias
            "qkv_w": nrm((H, 3 * H)), "qkv_b": jnp.zeros((3 * H,), jnp.float32),
            "ao_w": nrm((H, H)), "ao_b": jnp.zeros((H,), jnp.float32),
            "attn_ln_g": jnp.ones((H,), jnp.float32),
            "attn_ln_b": jnp.zeros((H,), jnp.float32),
            "i_w": nrm((H, I)), "i_b": jnp.zeros((I,), jnp.float32),
            "o_w": nrm((I, H)), "o_b": jnp.zeros((H,), jnp.float32),
            "out_ln_g": jnp.ones((H,), jnp.float32),
            "out_ln_b": jnp.zeros((H,), jnp.float32),
        })
    return p


def encoder_layer(h, p, mask_bias, cfg, B, S):
    H, nH = cfg["hidden"], cfg["heads"]
    # fused QKV projection: one matmul, one HBM read of h
    qkv = dense(h, p["qkv_w"], p["qkv_b"])                                   # [M, 3H]
    ctx = attention(qkv, mask_bias, B, S, H, nH)                             # [M, H]
    # attention output dense + residual + LayerNorm fused
    h = dense_add_layernorm(ctx, p["ao_w"], p["ao_b"], h,
                            p["attn_ln_g"], p["attn_ln_b"], cfg["eps"])
    # MLP: intermediate matmul with fused GELU, output matmul fused with +res+LN
    inter = dense(h, p["i_w"], p["i_b"], act="gelu")
    h = dense_add_layernorm(inter, p["o_w"], p["o_b"], h,
                            p["out_ln_g"], p["out_ln_b"], cfg["eps"])
    return h


def roberta_embedder(params, input_ids, attention_mask, cfg=CFG):
    """Returns pooler_output: tanh(W @ hidden[:, 0] + b), shape [B, H]."""
    B, S = input_ids.shape
    H = cfg["hidden"]

    # RoBERTa position ids: padding-aware cumulative positions offset by pad_id,
    # clamped so long sequences can never index past the position table.
    not_pad = (input_ids != cfg["pad_id"]).astype(jnp.int32)
    position_ids = jnp.cumsum(not_pad, axis=1) * not_pad + cfg["pad_id"]
    position_ids = jnp.minimum(position_ids, cfg["max_pos"] - 1)

    # TODO(synk): embedding-table gathers have no clean Pallas TPU equivalent; done in glue.
    word = jnp.take(params["word_emb"], input_ids, axis=0)
    pos = jnp.take(params["pos_emb"], position_ids, axis=0)
    tok = params["type_emb"][0][None, None, :]
    emb = (word + pos + tok).reshape(B * S, H).astype(jnp.float32)
    h = layernorm(emb, params["emb_ln_g"], params["emb_ln_b"], cfg["eps"])

    # Extended attention mask -> additive bias, kept at [B, 1, S] (not per-head).
    mask_bias = ((1.0 - attention_mask.astype(jnp.float32)) * -1e9)[:, None, :]

    for layer_p in params["layers"]:
        h = encoder_layer(h, layer_p, mask_bias, cfg, B, S)

    # Pooler on token 0 of each sequence: tiny B-row strided selection in glue
    # (reads only B rows), then a fused dense+tanh kernel.
    first = h[::S]                                                           # [B, H]
    pooled = dense(first, params["pooler_w"], params["pooler_b"],
                   act="tanh", out_dtype=jnp.float32)
    return pooled


# ----------------------------------- main ----------------------------------------

if __name__ == "__main__":
    key = jax.random.PRNGKey(0)
    k_param, k_ids = jax.random.split(key)

    B, S = 2, 8
    params = init_params(k_param, CFG)

    input_ids = jax.random.randint(k_ids, (B, S), 2, CFG["vocab"], dtype=jnp.int32)
    # make the last two tokens of sequence 1 padding to exercise the mask path
    input_ids = input_ids.at[1, -2:].set(CFG["pad_id"])
    attention_mask = jnp.ones((B, S), jnp.int32).at[1, -2:].set(0)

    pooled = roberta_embedder(params, input_ids, attention_mask)
    pooled = jax.block_until_ready(pooled)
    assert pooled.shape == (B, CFG["hidden"]) and pooled.dtype == jnp.float32
    assert bool(jnp.all(jnp.isfinite(pooled)))
    print("KERNEL_OK")
</pallas_src>

<mosaic_0001>
module attributes {stable_mosaic.version = 11 : i64} {
  func.func @_ln_kernel(%arg0: i32, %arg1: memref<16x128xf32, #tpu.memory_space<vmem>>, %arg2: memref<1x128xf32, #tpu.memory_space<vmem>>, %arg3: memref<1x128xf32, #tpu.memory_space<vmem>>, %arg4: memref<16x128xbf16, #tpu.memory_space<vmem>>) attributes {dimension_semantics = [#tpu.dimension_semantics<parallel>], iteration_bounds = array<i64: 1>, scalar_prefetch = 0 : i64, scratch_operands = 0 : i64, tpu.core_type = #tpu.core_type<tc>, window_params = [{transform_indices = @transform_0, window_bounds = array<i64: 16, 128>}, {pipeline_mode = #tpu.pipeline_mode<synchronous>, transform_indices = @transform_1, window_bounds = array<i64: 1, 128>}, {pipeline_mode = #tpu.pipeline_mode<synchronous>, transform_indices = @transform_2, window_bounds = array<i64: 1, 128>}, {transform_indices = @transform_3, window_bounds = array<i64: 16, 128>}]} {
    %c0 = arith.constant 0 : index
    %c0_0 = arith.constant 0 : index
    %0 = vector.load %arg1[%c0, %c0_0] : memref<16x128xf32, #tpu.memory_space<vmem>>, vector<16x128xf32>
    %cst = arith.constant dense<0.000000e+00> : vector<16xf32>
    %1 = vector.multi_reduction <add>, %0, %cst [1] : vector<16x128xf32> to vector<16xf32>
    %2 = vector.shape_cast %1 : vector<16xf32> to vector<16x1xf32>
    %cst_1 = arith.constant 1.280000e+02 : f32
    %3 = vector.broadcast %cst_1 : f32 to vector<16x1xf32>
    %4 = arith.divf %2, %3 : vector<16x1xf32>
    %5 = vector.broadcast %4 : vector<16x1xf32> to vector<16x128xf32>
    %6 = arith.subf %0, %5 : vector<16x128xf32>
    %7 = vector.broadcast %4 : vector<16x1xf32> to vector<16x128xf32>
    %8 = arith.subf %0, %7 : vector<16x128xf32>
    %9 = arith.mulf %6, %8 : vector<16x128xf32>
    %cst_2 = arith.constant dense<0.000000e+00> : vector<16xf32>
    %10 = vector.multi_reduction <add>, %9, %cst_2 [1] : vector<16x128xf32> to vector<16xf32>
    %11 = vector.shape_cast %10 : vector<16xf32> to vector<16x1xf32>
    %cst_3 = arith.constant 1.280000e+02 : f32
    %12 = vector.broadcast %cst_3 : f32 to vector<16x1xf32>
    %13 = arith.divf %11, %12 : vector<16x1xf32>
    %14 = vector.broadcast %4 : vector<16x1xf32> to vector<16x128xf32>
    %15 = arith.subf %0, %14 : vector<16x128xf32>
    %cst_4 = arith.constant 9.99999974E-6 : f32
    %16 = vector.broadcast %cst_4 : f32 to vector<16x1xf32>
    %17 = arith.addf %13, %16 : vector<16x1xf32>
    %18 = math.rsqrt %17 : vector<16x1xf32>
    %19 = vector.broadcast %18 : vector<16x1xf32> to vector<16x128xf32>
    %20 = arith.mulf %15, %19 : vector<16x128xf32>
    %c0_5 = arith.constant 0 : index
    %c0_6 = arith.constant 0 : index
    %21 = vector.load %arg2[%c0_5, %c0_6] : memref<1x128xf32, #tpu.memory_space<vmem>>, vector<1x128xf32>
    %22 = vector.broadcast %21 : vector<1x128xf32> to vector<16x128xf32>
    %23 = arith.mulf %20, %22 : vector<16x128xf32>
    %c0_7 = arith.constant 0 : index
    %c0_8 = arith.constant 0 : index
    %24 = vector.load %arg3[%c0_7, %c0_8] : memref<1x128xf32, #tpu.memory_space<vmem>>, vector<1x128xf32>
    %25 = vector.broadcast %24 : vector<1x128xf32> to vector<16x128xf32>
    %26 = arith.addf %23, %25 : vector<16x128xf32>
    %27 = arith.truncf %26 : vector<16x128xf32> to vector<16x128xbf16>
    %c0_9 = arith.constant 0 : index
    %c0_10 = arith.constant 0 : index
    %28 = vector.load %arg4[%c0_9, %c0_10] : memref<16x128xbf16, #tpu.memory_space<vmem>>, vector<16x128xbf16>
    tpu.vector_store %arg4[%c0_9, %c0_10], %27 {strides = array<i32>} : memref<16x128xbf16, #tpu.memory_space<vmem>>, vector<16x128xbf16>,
    return
  }
  func.func @transform_0(%arg0: i32) -> (i32, i32) {
    %c0_i32 = arith.constant 0 : i32
    %c0_i32_0 = arith.constant 0 : i32
    return %arg0, %c0_i32 : i32, i32
  }
  func.func @transform_1(%arg0: i32) -> (i32, i32) {
    %c0_i32 = arith.constant 0 : i32
    %c0_i32_0 = arith.constant 0 : i32
    %c0_i32_1 = arith.constant 0 : i32
    return %c0_i32, %c0_i32_0 : i32, i32
  }
  func.func @transform_2(%arg0: i32) -> (i32, i32) {
    %c0_i32 = arith.constant 0 : i32
    %c0_i32_0 = arith.constant 0 : i32
    %c0_i32_1 = arith.constant 0 : i32
    return %c0_i32, %c0_i32_0 : i32, i32
  }
  func.func @transform_3(%arg0: i32) -> (i32, i32) {
    %c0_i32 = arith.constant 0 : i32
    %c0_i32_0 = arith.constant 0 : i32
    return %arg0, %c0_i32 : i32, i32
  }
}

</mosaic_0001>

<llo_original>
// kernel: tpu_custom_call.1
$region0: #{tpu_custom_call.1}
  #allocation0 [shape = 'u32[]', space=smem, size = 0x4, offset = 0x4, fixed_abs, tag = 'smem constant byte address 0x4 - core index']
  #allocation1 [shape = 'u32[144,128]{1,0:T(1,128)}', space=vmem, size = 0x12000, scoped, tag = 'internal scratch']
  %s0 = inlined_call_operand.hbm [shape: f32[16,128], index: 0, kind: input, shape index: {}]
  %s1 = inlined_call_operand.vmem [shape: f32[1,128], index: 1, kind: input, shape index: {}]
  %s2 = inlined_call_operand.vmem [shape: f32[1,128], index: 2, kind: input, shape index: {}]
  %s3 = inlined_call_operand.hbm [shape: bf16[16,128], index: 3, kind: output, shape index: {}]
  %s4 = sld [smem:[#allocation0]]
  $region26: #{tpu_custom_call.1} parent=0
    _
  %s6 = ssub.s32 1, %s4
  %s7 = scalar_select 0, %s6, %s4
  $region1: #{tpu_custom_call.1} parent=0
    #allocation2 [shape = 'u8[8192]{0}', space=vmem, size = 0x2000, scoped, tag = 'input window, operand 0, single buffered']
    #allocation3 [shape = 's32[1]{0}', space=sflag, size = 0x4, scoped, tag = 'scoped memory for tpu_custom_call.1']
    #allocation4 [shape = 's32[1]{0}', space=sflag, size = 0x4, scoped, tag = 'scoped memory for tpu_custom_call.1']
    #allocation5 [shape = 'u8[4096]{0}', space=vmem, size = 0x1000, scoped, tag = 'output window, operand 0, single buffered']
    %8 = vsyncpa [#allocation3], 0
    %9 = vsyncpa [#allocation4], 0
    // Predicated region
    $region2: #{tpu_custom_call.1} parent=1 // pred_check
      _
    $region3: #{tpu_custom_call.1} parent=1 // pred_check_branch
      %11 = sbr.rel (0) target = $region5
    $region4: #{tpu_custom_call.1} parent=1 // pred_region
      %s13 = ssub.s32 256, 256
      %14 = vsyncadd [#allocation3], %s13
      %s15 = sshll.u32 [#allocation2], 4
      %s16 = int_to_ptr.vmem [resolvable:$true] %s15
      %21 = dma.hbm_to_vmem [thread:$0]  %s0, 256, %s16, [#allocation3], 128, 128, 8
    $region5: #{tpu_custom_call.1} parent=1 // pred_fallthru
      _
    // Predicated region
    $region6: #{tpu_custom_call.1} parent=1 // pred_check
      _
    $region7: #{tpu_custom_call.1} parent=1 // pred_check_branch
      %23 = sbr.rel (0) target = $region9
    $region8: #{tpu_custom_call.1} parent=1 // pred_region
      _
    $region9: #{tpu_custom_call.1} parent=1 // pred_fallthru
      _
    // Predicated region
    $region10: #{tpu_custom_call.1} parent=1 // pred_check
      _
    $region11: #{tpu_custom_call.1} parent=1 // pred_check_branch
      %25 = sbr.rel (0) target = $region13
    $region12: #{tpu_custom_call.1} parent=1 // pred_region
      _
    $region13: #{tpu_custom_call.1} parent=1 // pred_fallthru
      _
    // Predicated region
    $region14: #{tpu_custom_call.1} parent=1 // pred_check
      _
    $region15: #{tpu_custom_call.1} parent=1 // pred_check_branch
      %27 = sbr.rel (0) target = $region17
    $region16: #{tpu_custom_call.1} parent=1 // pred_region
      %28 = dma.done [#allocation3], 256
    $region17: #{tpu_custom_call.1} parent=1 // pred_fallthru
      _
    %v29 = vld [vmem:[#allocation2] sm:$0xff]
    %v30 = vld [vmem:[#allocation2 + $0x8] sm:$0xff]
    %31 = vadd.xlane.f32.xlu0 %v29
    %v32 = vpop.xlane.xlu0 %31
    %33 = vadd.xlane.f32.xlu0 %v30
    %v34 = vpop.xlane.xlu0 %33
    %v35 = vrcp.pop 128.0
    %v36 = vmul.f32 %v32, %v35
    %v37 = vmul.f32 %v34, %v35
    %v38 = vsub.f32 %v29, %v36
    %v39 = vsub.f32 %v30, %v37
    %v40 = vmul.f32 %v38, %v38
    %v41 = vmul.f32 %v39, %v39
    %42 = vadd.xlane.f32.xlu0 %v40
    %v43 = vpop.xlane.xlu0 %42
    %44 = vadd.xlane.f32.xlu0 %v41
    %v45 = vpop.xlane.xlu0 %44
    %v46 = vmul.f32 %v43, %v35
    %v47 = vmul.f32 %v45, %v35
    %v48 = vadd.f32 %v46, 1e-05
    %v49 = vadd.f32 %v47, 1e-05
    %v50 = vrsqrt.pop %v48
    %v51 = vrsqrt.pop %v49
    %v52 = vmul.f32 %v38, %v50
    %v53 = vmul.f32 %v39, %v51
    %v54 = vld [vmem:[%s1] sm:$0x1]
    %v56 = vlaneseq
    %v57 = vshrl.u32 %v56, 7
    %v58 = vsub.s32 0, %v57
    %v59 = vrot.slane %v54, %v58
    %v61 = vmul.f32 %v52, %v59
    %v62 = vmul.f32 %v53, %v59
    %v63 = vld [vmem:[%s2] sm:$0x1]
    %v65 = vlaneseq
    %v66 = vshrl.u32 %v65, 7
    %v67 = vsub.s32 0, %v66
    %v68 = vrot.slane %v63, %v67
    %v70 = vadd.f32 %v61, %v68
    %v71 = vadd.f32 %v62, %v68
    %v72 = vpack.c.bf16 %v71, %v70
    %v74 = vunpack.c.l.b16 %v72
    %v75 = vunpack.c.h.b16 %v72
    %v76 = vpack.c.b16 %v74, %v74
    %v77 = vpack.c.b16 %v75, %v75
    %80 = vst [vmem:[#allocation5] sm:$0xf] %v76
    %81 = vst [vmem:[#allocation5 + $0x4] sm:$0xf] %v77
    // Predicated region
    $region18: #{tpu_custom_call.1} parent=1 // pred_check
      _
    $region19: #{tpu_custom_call.1} parent=1 // pred_check_branch
      %83 = sbr.rel (0) target = $region21
    $region20: #{tpu_custom_call.1} parent=1 // pred_region
      %s85 = ssub.s32 128, 128
      %86 = vsyncadd [#allocation4], %s85
      %s87 = sshll.u32 [#allocation5], 4
      %s88 = int_to_ptr.vmem [resolvable:$true] %s87
      %93 = dma.vmem_to_hbm [thread:$0]  %s88, 128, %s3, [#allocation4], 64, 64, 4
    $region21: #{tpu_custom_call.1} parent=1 // pred_fallthru
      _
    // Predicated region
    $region22: #{tpu_custom_call.1} parent=1 // pred_check
      _
    $region23: #{tpu_custom_call.1} parent=1 // pred_check_branch
      %95 = sbr.rel (0) target = $region25
    $region24: #{tpu_custom_call.1} parent=1 // pred_region
      %96 = dma.done [#allocation4], 128
    $region25: #{tpu_custom_call.1} parent=1 // pred_fallthru
      _
    %97 = vsyncpa [#allocation3], 1
    %98 = vsyncpa [#allocation4], 1

</llo_original>
